<compile_context>
chip_gen: v7x
topology: tpu7x:2x2x1
jax: 0.10.0
libtpu: 0.0.40
codegen_flags: <defaults>
</compile_context>

<pallas_src>
import functools

import numpy as np
import jax
import jax.numpy as jnp
from jax.experimental import pallas as pl
from jax.experimental.pallas import tpu as pltpu


# --------------------------------------------------------------------------------------
# Kernels
# --------------------------------------------------------------------------------------

def _sdpa_weights_kernel(*refs, d_k, has_mask, mm_dtype):
    # Blocks: q (G,TQ,Dk), k (G,Sk,Dk), v (G,Sk,Dv), [mask (Gm,TQm,Skm)],
    #         ctx (G,TQ,Dv), attn (G,TQ,Sk)
    if has_mask:
        q_ref, k_ref, v_ref, mask_ref, ctx_ref, attn_ref = refs
    else:
        q_ref, k_ref, v_ref, ctx_ref, attn_ref = refs
        mask_ref = None

    q = q_ref[...]
    k = k_ref[...]
    v = v_ref[...]
    scale = jnp.float32(1.0 / (d_k ** 0.5))

    qk_dims = (((2,), (2,)), ((0,), (0,)))   # contract Dk, batch over G (no explicit k.T)
    av_dims = (((2,), (1,)), ((0,), (0,)))   # contract Sk, batch over G

    if mm_dtype is not None:
        scores = jax.lax.dot_general((q.astype(jnp.float32) * scale).astype(mm_dtype),
                                     k.astype(mm_dtype), qk_dims,
                                     preferred_element_type=jnp.float32)
    elif q.dtype == jnp.float32:
        # Fold 1/sqrt(d_k) into q: (TQ,Dk) multiplies instead of (TQ,Sk).
        scores = jax.lax.dot_general(q * scale, k, qk_dims,
                                     preferred_element_type=jnp.float32)
    else:
        scores = jax.lax.dot_general(q, k, qk_dims,
                                     preferred_element_type=jnp.float32) * scale

    if has_mask:
        # masked_fill_(attn_mask, -1e9): True / nonzero = masked.
        # Mask block keeps broadcast singleton dims; jnp.where broadcasts them here.
        scores = jnp.where(mask_ref[...] != 0, jnp.float32(-1.0e9), scores)

    # Numerically stable softmax over Sk, in f32 (torch.softmax parity).
    m = jnp.max(scores, axis=-1, keepdims=True)
    e = jnp.exp(scores - m)
    denom = jnp.sum(e, axis=-1, keepdims=True)
    attn = e * pl.reciprocal(denom, approx=False)   # exact: emitted rows sum to 1

    av_dtype = mm_dtype if mm_dtype is not None else v.dtype
    ctx = jax.lax.dot_general(attn.astype(av_dtype), v.astype(av_dtype), av_dims,
                              preferred_element_type=jnp.float32)

    ctx_ref[...] = ctx.astype(ctx_ref.dtype)
    attn_ref[...] = attn.astype(attn_ref.dtype)


def _sdpa_flash_kernel(*refs, d_k, has_mask, mm_dtype):
    # Context-only, KV-tiled online softmax.
    # Blocks: q (G,TQ,Dk), k (G,TK,Dk), v (G,TK,Dv), [mask (Gm,TQm,TKm)], ctx (G,TQ,Dv)
    # Scratch: m (G,TQ,1) f32, l (G,TQ,1) f32, acc (G,TQ,Dv) f32
    if has_mask:
        q_ref, k_ref, v_ref, mask_ref, ctx_ref, m_sc, l_sc, acc_sc = refs
    else:
        q_ref, k_ref, v_ref, ctx_ref, m_sc, l_sc, acc_sc = refs
        mask_ref = None

    t = pl.program_id(2)

    @pl.when(t == 0)
    def _():
        m_sc[...] = jnp.full_like(m_sc, -jnp.inf)
        l_sc[...] = jnp.zeros_like(l_sc)
        acc_sc[...] = jnp.zeros_like(acc_sc)

    q = q_ref[...]
    k = k_ref[...]
    v = v_ref[...]
    scale = jnp.float32(1.0 / (d_k ** 0.5))

    qk_dims = (((2,), (2,)), ((0,), (0,)))
    av_dims = (((2,), (1,)), ((0,), (0,)))

    if mm_dtype is not None:
        s = jax.lax.dot_general((q.astype(jnp.float32) * scale).astype(mm_dtype),
                                k.astype(mm_dtype), qk_dims,
                                preferred_element_type=jnp.float32)
    elif q.dtype == jnp.float32:
        s = jax.lax.dot_general(q * scale, k, qk_dims,
                                preferred_element_type=jnp.float32)
    else:
        s = jax.lax.dot_general(q, k, qk_dims,
                                preferred_element_type=jnp.float32) * scale

    if has_mask:
        s = jnp.where(mask_ref[...] != 0, jnp.float32(-1.0e9), s)

    m_prev = m_sc[...]
    m_new = jnp.maximum(m_prev, jnp.max(s, axis=-1, keepdims=True))
    alpha = jnp.exp(m_prev - m_new)
    p = jnp.exp(s - m_new)
    l_sc[...] = alpha * l_sc[...] + jnp.sum(p, axis=-1, keepdims=True)

    av_dtype = mm_dtype if mm_dtype is not None else v.dtype
    acc_sc[...] = alpha * acc_sc[...] + jax.lax.dot_general(
        p.astype(av_dtype), v.astype(av_dtype), av_dims,
        preferred_element_type=jnp.float32)
    m_sc[...] = m_new

    @pl.when(t == pl.num_programs(2) - 1)
    def _():
        # Deferred normalization: one (G,TQ,Dv) multiply after the AV matmuls instead of
        # a (G,TQ,Sk) one before.  Exact reciprocal keeps strict parity; approx=True is a
        # valid EUP-slot variant if ~1e-4 rel. error is acceptable.
        ctx_ref[...] = (acc_sc[...] *
                        pl.reciprocal(l_sc[...], approx=False)).astype(ctx_ref.dtype)


# --------------------------------------------------------------------------------------
# Sizing helpers
# --------------------------------------------------------------------------------------

def _vmem_budget_and_limit():
    """Generation-aware (budget, vmem_limit) in bytes."""
    cap = None
    try:
        info = pltpu.get_tpu_info()
        cap = getattr(info, "vmem_capacity_bytes", None)
    except Exception:
        cap = None
    if not cap:
        cap = 64 * 1024 * 1024          # conservative fallback (v7x per-TC VMEM)
    limit = int(min(cap * 0.75, 100 * 1024 * 1024))
    budget = int(cap * 0.40)
    return budget, limit


def _estimate_vmem(g, tq, sk_blk, dk, dv, itemsize, extra_io_bytes):
    """Per-step VMEM estimate: double-buffered I/O blocks + f32 intermediates + headroom."""
    io = g * (tq * dk + sk_blk * (dk + dv) + tq * dv) * itemsize + extra_io_bytes
    bufs = 2 * io
    # f32 scores + exp + attn/p cast copy + f32 ctx accumulator (and flash m/l scratch).
    inter = 3 * g * tq * sk_blk * 4 + g * tq * dv * 4 + g * tq * sk_blk * itemsize
    return int(1.25 * (bufs + inter))


def _choose_tiles(bh, sq, sk_blk, dk, dv, itemsize, budget, extra_io_fn,
                  max_group=8, tq_cap=1024):
    """Jointly pick (TQ, G): largest work-per-step that fits the VMEM budget."""
    cands = []
    if sq <= tq_cap:
        cands.append(sq)
    cands += [t for t in range(tq_cap - (tq_cap % 128), 127, -128)
              if t < sq and sq % t == 0]
    if not cands:
        cands = [sq]   # no 128-multiple divisor: fall back to untiled Sq
    groups = [g for g in range(min(bh, max_group), 0, -1) if bh % g == 0]
    best, best_work = None, -1
    for tq in cands:
        for g in groups:
            if _estimate_vmem(g, tq, sk_blk, dk, dv, itemsize,
                              extra_io_fn(g, tq)) <= budget:
                if g * tq > best_work:
                    best_work, best = g * tq, (tq, g)
                break
    if best is None:
        best = (min(cands), 1)
    return best


def _pick_kv_block(sk, requested=None, cap=512):
    if requested is not None:
        if sk % requested != 0:
            raise ValueError("kv_block_size must divide Sk")
        return requested
    if sk <= cap:
        return sk
    for t in range(cap - (cap % 128), 127, -128):
        if sk % t == 0:
            return t
    return sk


def _prepare_mask(attn_mask, B, H, Sq, Sk):
    """Normalize a broadcastable mask WITHOUT materializing broadcast Sq/Sk dims.

    Returns (mask[BH or 1, Sqm, Skm], per_bh, sq_full, sk_full)."""
    m = jnp.asarray(attn_mask)
    if m.ndim > 4:
        raise ValueError("attn_mask has more than 4 dims")
    m = m.reshape((1,) * (4 - m.ndim) + m.shape)
    mb, mh, mq, mk = m.shape
    for got, want, name in ((mb, B, "batch"), (mh, H, "heads"),
                            (mq, Sq, "Sq"), (mk, Sk, "Sk")):
        if got not in (1, want):
            raise ValueError(f"attn_mask {name} dim {got} not broadcastable to {want}")
    per_bh = (mb != 1) or (mh != 1)
    sq_full = mq != 1
    sk_full = mk != 1
    if per_bh:
        m = jnp.broadcast_to(m, (B, H, mq, mk)).reshape(B * H, mq, mk)
    else:
        m = m.reshape(1, mq, mk)
    # int8 when the lane (Sk) dim is real; int32 for the tiny Sk-broadcast case.
    mask_dtype = jnp.int8 if sk_full else jnp.int32
    return m.astype(mask_dtype), per_bh, sq_full, sk_full


def _mask_index_map(per_bh, sq_full, sk_full, grid_ndim):
    if grid_ndim == 2:
        def imap(g, s):
            return (g if per_bh else 0, s if sq_full else 0, 0)
    else:
        def imap(g, s, t):
            return (g if per_bh else 0, s if sq_full else 0, t if sk_full else 0)
    return imap


# --------------------------------------------------------------------------------------
# Wrapper
# --------------------------------------------------------------------------------------

def scaled_dot_product_attention(q, k, v, attn_mask=None, *,
                                 return_attn_weights=True,
                                 weights_dtype=None,
                                 allow_bf16_matmul=False,
                                 kv_block_size=None):
    """Pallas implementation of ScaledDotProductAttention.forward.

    q: [B, H, Sq, Dk], k: [B, H, Sk, Dk], v: [B, H, Sk, Dv]
    attn_mask: optional bool/int mask broadcastable to [B, H, Sq, Sk];
               True / nonzero positions are filled with -1e9 before softmax
               (same polarity as scores.masked_fill_(attn_mask, -1e9)).
    Returns (context, attn_weights) or just context if return_attn_weights=False.
    """
    B, H, Sq, Dk = q.shape
    Sk = k.shape[2]
    Dv = v.shape[3]
    BH = B * H
    itemsize = q.dtype.itemsize

    qf = q.reshape(BH, Sq, Dk)
    kf = k.reshape(BH, Sk, Dk)
    vf = v.reshape(BH, Sk, Dv)

    has_mask = attn_mask is not None
    mask_arr, per_bh, sq_full, sk_full = (None, False, False, False)
    mask_itemsize = 0
    if has_mask:
        mask_arr, per_bh, sq_full, sk_full = _prepare_mask(attn_mask, B, H, Sq, Sk)
        mask_itemsize = mask_arr.dtype.itemsize

    mm_dtype = jnp.bfloat16 if (allow_bf16_matmul and q.dtype == jnp.float32) else None
    budget, vmem_limit = _vmem_budget_and_limit()

    w_dtype = None
    if return_attn_weights:
        w_dtype = q.dtype if weights_dtype is None else np.dtype(weights_dtype)

    # Advisory cost estimate for XLA's scheduler.
    in_bytes = (qf.size + kf.size + vf.size) * itemsize
    if has_mask:
        in_bytes += mask_arr.size * mask_itemsize
    out_bytes = BH * Sq * Dv * itemsize
    if return_attn_weights:
        out_bytes += BH * Sq * Sk * w_dtype.itemsize
    cost = pl.CostEstimate(flops=2 * BH * Sq * Sk * (Dk + Dv),
                           transcendentals=BH * Sq * Sk,
                           bytes_accessed=in_bytes + out_bytes)

    if return_attn_weights:
        # --- full-Sk kernel (weights output is inherently O(Sq*Sk)) ---
        def extra_io(g, tq):
            b = g * tq * Sk * w_dtype.itemsize          # attn output tile
            if has_mask:
                b += ((g if per_bh else 1) * (tq if sq_full else 1)
                      * (Sk if sk_full else 1) * mask_itemsize)
            return b

        TQ, G = _choose_tiles(BH, Sq, Sk, Dk, Dv, itemsize, budget, extra_io)
        grid = (BH // G, Sq // TQ)

        in_specs = [
            pl.BlockSpec((G, TQ, Dk), lambda g, s: (g, s, 0)),
            pl.BlockSpec((G, Sk, Dk), lambda g, s: (g, 0, 0)),   # revisited along s
            pl.BlockSpec((G, Sk, Dv), lambda g, s: (g, 0, 0)),   # revisited along s
        ]
        inputs = [qf, kf, vf]
        if has_mask:
            mask_block = (G if per_bh else 1, TQ if sq_full else 1, Sk if sk_full else 1)
            in_specs.append(pl.BlockSpec(mask_block,
                                         _mask_index_map(per_bh, sq_full, sk_full, 2)))
            inputs.append(mask_arr)

        out_shapes = (jax.ShapeDtypeStruct((BH, Sq, Dv), q.dtype),
                      jax.ShapeDtypeStruct((BH, Sq, Sk), w_dtype))
        out_specs = [pl.BlockSpec((G, TQ, Dv), lambda g, s: (g, s, 0)),
                     pl.BlockSpec((G, TQ, Sk), lambda g, s: (g, s, 0))]

        kernel = functools.partial(_sdpa_weights_kernel, d_k=Dk, has_mask=has_mask,
                                   mm_dtype=mm_dtype)
        ctxf, attnf = pl.pallas_call(
            kernel,
            out_shape=out_shapes,
            grid_spec=pltpu.PrefetchScalarGridSpec(
                num_scalar_prefetch=0, grid=grid,
                in_specs=in_specs, out_specs=out_specs),
            compiler_params=pltpu.CompilerParams(
                # BH axis parallel, query axis arbitrary: a megacore split lands on BH so
                # the two TensorCores stream disjoint K/V.
                dimension_semantics=("parallel", "arbitrary"),
                vmem_limit_bytes=vmem_limit),
            cost_estimate=cost,
        )(*inputs)
        return ctxf.reshape(B, H, Sq, Dv), attnf.reshape(B, H, Sq, Sk)

    # --- context-only: flash-style KV tiling with online softmax ---
    TK = _pick_kv_block(Sk, kv_block_size)

    def extra_io(g, tq):
        if not has_mask:
            return 0
        return ((g if per_bh else 1) * (tq if sq_full else 1)
                * (TK if sk_full else 1) * mask_itemsize)

    TQ, G = _choose_tiles(BH, Sq, TK, Dk, Dv, itemsize, budget, extra_io)
    grid = (BH // G, Sq // TQ, Sk // TK)

    in_specs = [
        pl.BlockSpec((G, TQ, Dk), lambda g, s, t: (g, s, 0)),
        pl.BlockSpec((G, TK, Dk), lambda g, s, t: (g, t, 0)),
        pl.BlockSpec((G, TK, Dv), lambda g, s, t: (g, t, 0)),
    ]
    inputs = [qf, kf, vf]
    if has_mask:
        mask_block = (G if per_bh else 1, TQ if sq_full else 1, TK if sk_full else 1)
        in_specs.append(pl.BlockSpec(mask_block,
                                     _mask_index_map(per_bh, sq_full, sk_full, 3)))
        inputs.append(mask_arr)

    kernel = functools.partial(_sdpa_flash_kernel, d_k=Dk, has_mask=has_mask,
                               mm_dtype=mm_dtype)
    ctxf = pl.pallas_call(
        kernel,
        out_shape=jax.ShapeDtypeStruct((BH, Sq, Dv), q.dtype),
        grid_spec=pltpu.PrefetchScalarGridSpec(
            num_scalar_prefetch=0, grid=grid,
            in_specs=in_specs,
            out_specs=pl.BlockSpec((G, TQ, Dv), lambda g, s, t: (g, s, 0)),
            scratch_shapes=[pltpu.VMEM((G, TQ, 1), jnp.float32),
                            pltpu.VMEM((G, TQ, 1), jnp.float32),
                            pltpu.VMEM((G, TQ, Dv), jnp.float32)]),
        compiler_params=pltpu.CompilerParams(
            dimension_semantics=("parallel", "arbitrary", "arbitrary"),
            vmem_limit_bytes=vmem_limit),
        cost_estimate=cost,
    )(*inputs)
    return ctxf.reshape(B, H, Sq, Dv)


# --------------------------------------------------------------------------------------
# Reference + self-test
# --------------------------------------------------------------------------------------

def _reference(q, k, v, attn_mask=None):
    d_k = k.shape[-1]
    scores = jnp.einsum("bhqd,bhkd->bhqk", q, k,
                        precision=jax.lax.Precision.HIGHEST) / jnp.sqrt(jnp.float32(d_k))
    if attn_mask is not None:
        scores = jnp.where(attn_mask, -1.0e9, scores)
    attn = jax.nn.softmax(scores, axis=-1)
    ctx = jnp.einsum("bhqk,bhkd->bhqd", attn, v,
                     precision=jax.lax.Precision.HIGHEST)
    return ctx, attn


if __name__ == "__main__":
    key = jax.random.PRNGKey(0)
    kq, kk, kv, kq2, kk2, kv2 = jax.random.split(key, 6)

    # ---- 1/2: full-weights path (strict torch parity), tiny shapes ----
    B, H, Sq, Sk, Dk, Dv = 2, 2, 8, 8, 32, 32
    q = jax.random.normal(kq, (B, H, Sq, Dk), dtype=jnp.float32)
    k = jax.random.normal(kk, (B, H, Sk, Dk), dtype=jnp.float32)
    v = jax.random.normal(kv, (B, H, Sk, Dv), dtype=jnp.float32)
    causal = jnp.triu(jnp.ones((Sq, Sk), dtype=jnp.bool_), k=1)   # True = masked

    ctx, attn = scaled_dot_product_attention(q, k, v, causal)      # [Sq,Sk] mask, never broadcast
    ctx = jax.block_until_ready(ctx)
    attn = jax.block_until_ready(attn)
    ref_ctx, ref_attn = _reference(q, k, v, causal)
    assert jnp.allclose(ctx, ref_ctx, atol=1e-5, rtol=1e-5)
    assert jnp.allclose(attn, ref_attn, atol=1e-5, rtol=1e-5)

    ctx_nm, attn_nm = scaled_dot_product_attention(q, k, v)        # mask-free variant
    jax.block_until_ready(ctx_nm)
    ref_ctx_nm, ref_attn_nm = _reference(q, k, v)
    assert jnp.allclose(ctx_nm, ref_ctx_nm, atol=1e-5, rtol=1e-5)
    assert jnp.allclose(attn_nm, ref_attn_nm, atol=1e-5, rtol=1e-5)

    # ---- 3/4: context-only flash path, KV tiled into 2 blocks ----
    B2, H2, Sq2, Sk2 = 2, 2, 8, 256
    q2 = jax.random.normal(kq2, (B2, H2, Sq2, Dk), dtype=jnp.float32)
    k2 = jax.random.normal(kk2, (B2, H2, Sk2, Dk), dtype=jnp.float32)
    v2 = jax.random.normal(kv2, (B2, H2, Sk2, Dv), dtype=jnp.float32)
    # Per-batch key-padding-style mask, broadcastable shape [B,1,1,Sk] (True = masked).
    key_pad = (jnp.arange(Sk2)[None, None, None, :]
               >= jnp.array([200, 256])[:, None, None, None])

    ctx2 = scaled_dot_product_attention(q2, k2, v2, key_pad,
                                        return_attn_weights=False, kv_block_size=128)
    jax.block_until_ready(ctx2)
    ref_ctx2, _ = _reference(q2, k2, v2, key_pad)
    assert jnp.allclose(ctx2, ref_ctx2, atol=1e-4, rtol=1e-4)

    ctx3 = scaled_dot_product_attention(q2, k2, v2,
                                        return_attn_weights=False, kv_block_size=128)
    jax.block_until_ready(ctx3)
    ref_ctx3, _ = _reference(q2, k2, v2)
    assert jnp.allclose(ctx3, ref_ctx3, atol=1e-4, rtol=1e-4)

    print("KERNEL_OK")
</pallas_src>

<mosaic_0001>
module attributes {stable_mosaic.version = 11 : i64} {
  func.func @_sdpa_weights_kernel(%arg0: i32, %arg1: i32, %arg2: memref<4x8x32xf32, #tpu.memory_space<vmem>>, %arg3: memref<4x8x32xf32, #tpu.memory_space<vmem>>, %arg4: memref<4x8x32xf32, #tpu.memory_space<vmem>>, %arg5: memref<1x8x8xi8, #tpu.memory_space<vmem>>, %arg6: memref<4x8x32xf32, #tpu.memory_space<vmem>>, %arg7: memref<4x8x8xf32, #tpu.memory_space<vmem>>) attributes {dimension_semantics = [#tpu.dimension_semantics<parallel>, #tpu.dimension_semantics<arbitrary>], iteration_bounds = array<i64: 1, 1>, scalar_prefetch = 0 : i64, scratch_operands = 0 : i64, tpu.core_type = #tpu.core_type<tc>, window_params = [{transform_indices = @transform_0, window_bounds = array<i64: 4, 8, 32>}, {transform_indices = @transform_1, window_bounds = array<i64: 4, 8, 32>}, {transform_indices = @transform_2, window_bounds = array<i64: 4, 8, 32>}, {transform_indices = @transform_3, window_bounds = array<i64: 1, 8, 8>}, {transform_indices = @transform_4, window_bounds = array<i64: 4, 8, 32>}, {transform_indices = @transform_5, window_bounds = array<i64: 4, 8, 8>}]} {
    %c0 = arith.constant 0 : index
    %c0_0 = arith.constant 0 : index
    %c0_1 = arith.constant 0 : index
    %0 = vector.load %arg2[%c0, %c0_0, %c0_1] : memref<4x8x32xf32, #tpu.memory_space<vmem>>, vector<4x8x32xf32>
    %c0_2 = arith.constant 0 : index
    %c0_3 = arith.constant 0 : index
    %c0_4 = arith.constant 0 : index
    %1 = vector.load %arg3[%c0_2, %c0_3, %c0_4] : memref<4x8x32xf32, #tpu.memory_space<vmem>>, vector<4x8x32xf32>
    %c0_5 = arith.constant 0 : index
    %c0_6 = arith.constant 0 : index
    %c0_7 = arith.constant 0 : index
    %2 = vector.load %arg4[%c0_5, %c0_6, %c0_7] : memref<4x8x32xf32, #tpu.memory_space<vmem>>, vector<4x8x32xf32>
    %cst = arith.constant 0.176776692 : f32
    %3 = vector.broadcast %cst : f32 to vector<4x8x32xf32>
    %4 = arith.mulf %0, %3 : vector<4x8x32xf32>
    %cst_8 = arith.constant dense<0.000000e+00> : vector<4x8x8xf32>
    %5 = tpu.matmul %4, %1, %cst_8 {dimension_numbers = #tpu.dot_dimension_numbers<[2], [2], [1], [1], [0, 0, 0, 1, 1, 1], [0], [0]>} : vector<4x8x32xf32>, vector<4x8x32xf32>, vector<4x8x8xf32> -> vector<4x8x8xf32>
    %c0_9 = arith.constant 0 : index
    %c0_10 = arith.constant 0 : index
    %c0_11 = arith.constant 0 : index
    %6 = vector.load %arg5[%c0_9, %c0_10, %c0_11] : memref<1x8x8xi8, #tpu.memory_space<vmem>>, vector<1x8x8xi8>
    %c0_i8 = arith.constant 0 : i8
    %7 = vector.broadcast %c0_i8 : i8 to vector<1x8x8xi8>
    %8 = arith.cmpi ne, %6, %7 : vector<1x8x8xi8>
    %cst_12 = arith.constant -1.000000e+09 : f32
    %9 = vector.shape_cast %8 : vector<1x8x8xi1> to vector<1x8x8xi1>
    %10 = vector.broadcast %9 : vector<1x8x8xi1> to vector<4x8x8xi1>
    %11 = vector.broadcast %cst_12 : f32 to vector<4x8x8xf32>
    %12 = arith.select %10, %11, %5 : vector<4x8x8xi1>, vector<4x8x8xf32>
    %cst_13 = arith.constant dense<0xFF800000> : vector<4x8xf32>
    %13 = vector.multi_reduction <maximumf>, %12, %cst_13 [2] : vector<4x8x8xf32> to vector<4x8xf32>
    %14 = vector.shape_cast %13 : vector<4x8xf32> to vector<4x8x1xf32>
    %15 = vector.broadcast %14 : vector<4x8x1xf32> to vector<4x8x8xf32>
    %16 = arith.subf %12, %15 : vector<4x8x8xf32>
    %17 = math.exp %16 : vector<4x8x8xf32>
    %cst_14 = arith.constant dense<0.000000e+00> : vector<4x8xf32>
    %18 = vector.multi_reduction <add>, %17, %cst_14 [2] : vector<4x8x8xf32> to vector<4x8xf32>
    %19 = vector.shape_cast %18 : vector<4x8xf32> to vector<4x8x1xf32>
    %20 = tpu.reciprocal %19 : vector<4x8x1xf32> -> vector<4x8x1xf32>
    %21 = vector.broadcast %20 : vector<4x8x1xf32> to vector<4x8x8xf32>
    %22 = arith.mulf %17, %21 : vector<4x8x8xf32>
    %cst_15 = arith.constant dense<0.000000e+00> : vector<4x8x32xf32>
    %23 = tpu.matmul %22, %2, %cst_15 {dimension_numbers = #tpu.dot_dimension_numbers<[2], [1], [1], [2], [0, 0, 0, 1, 1, 2], [0], [0]>} : vector<4x8x8xf32>, vector<4x8x32xf32>, vector<4x8x32xf32> -> vector<4x8x32xf32>
    %c0_16 = arith.constant 0 : index
    %c0_17 = arith.constant 0 : index
    %c0_18 = arith.constant 0 : index
    %24 = vector.load %arg6[%c0_16, %c0_17, %c0_18] : memref<4x8x32xf32, #tpu.memory_space<vmem>>, vector<4x8x32xf32>
    tpu.vector_store %arg6[%c0_16, %c0_17, %c0_18], %23 {strides = array<i32>} : memref<4x8x32xf32, #tpu.memory_space<vmem>>, vector<4x8x32xf32>,
    %c0_19 = arith.constant 0 : index
    %c0_20 = arith.constant 0 : index
    %c0_21 = arith.constant 0 : index
    %25 = vector.load %arg7[%c0_19, %c0_20, %c0_21] : memref<4x8x8xf32, #tpu.memory_space<vmem>>, vector<4x8x8xf32>
    tpu.vector_store %arg7[%c0_19, %c0_20, %c0_21], %22 {strides = array<i32>} : memref<4x8x8xf32, #tpu.memory_space<vmem>>, vector<4x8x8xf32>,
    return
  }
  func.func @transform_0(%arg0: i32, %arg1: i32) -> (i32, i32, i32) {
    %c0_i32 = arith.constant 0 : i32
    %c0_i32_0 = arith.constant 0 : i32
    return %arg0, %arg1, %c0_i32 : i32, i32, i32
  }
  func.func @transform_1(%arg0: i32, %arg1: i32) -> (i32, i32, i32) {
    %c0_i32 = arith.constant 0 : i32
    %c0_i32_0 = arith.constant 0 : i32
    %c0_i32_1 = arith.constant 0 : i32
    return %arg0, %c0_i32, %c0_i32_0 : i32, i32, i32
  }
  func.func @transform_2(%arg0: i32, %arg1: i32) -> (i32, i32, i32) {
    %c0_i32 = arith.constant 0 : i32
    %c0_i32_0 = arith.constant 0 : i32
    %c0_i32_1 = arith.constant 0 : i32
    return %arg0, %c0_i32, %c0_i32_0 : i32, i32, i32
  }
  func.func @transform_3(%arg0: i32, %arg1: i32) -> (i32, i32, i32) {
    %c0_i32 = arith.constant 0 : i32
    %c0_i32_0 = arith.constant 0 : i32
    %c0_i32_1 = arith.constant 0 : i32
    return %c0_i32, %arg1, %c0_i32_0 : i32, i32, i32
  }
  func.func @transform_4(%arg0: i32, %arg1: i32) -> (i32, i32, i32) {
    %c0_i32 = arith.constant 0 : i32
    %c0_i32_0 = arith.constant 0 : i32
    return %arg0, %arg1, %c0_i32 : i32, i32, i32
  }
  func.func @transform_5(%arg0: i32, %arg1: i32) -> (i32, i32, i32) {
    %c0_i32 = arith.constant 0 : i32
    %c0_i32_0 = arith.constant 0 : i32
    return %arg0, %arg1, %c0_i32 : i32, i32, i32
  }
}

</mosaic_0001>

<llo_original>
// kernel: tpu_custom_call.1
$region0: #{tpu_custom_call.1}
  #allocation0 [shape = 'u32[]', space=smem, size = 0x4, offset = 0x4, fixed_abs, tag = 'smem constant byte address 0x4 - core index']
  #allocation1 [shape = 'u32[144,128]{1,0:T(1,128)}', space=vmem, size = 0x12000, scoped, tag = 'internal scratch']
  %s0 = inlined_call_operand.hbm [shape: f32[4,8,32], index: 0, kind: input, shape index: {}]
  %s1 = inlined_call_operand.hbm [shape: f32[4,8,32], index: 1, kind: input, shape index: {}]
  %s2 = inlined_call_operand.hbm [shape: f32[4,8,32], index: 2, kind: input, shape index: {}]
  %s3 = inlined_call_operand.vmem [shape: s8[1,8,8], index: 3, kind: input, shape index: {}]
  %s4 = inlined_call_operand.hbm [shape: f32[4,8,32], index: 4, kind: output, shape index: {0}]
  %s5 = inlined_call_operand.hbm [shape: f32[4,8,8], index: 5, kind: output, shape index: {1}]
  %6 = xla_tuple %s4, %s5
  %s7 = sld [smem:[#allocation0]]
  $region46: #{tpu_custom_call.1} parent=0
    _
  %s9 = ssub.s32 1, %s7
  %s10 = scalar_select 0, %s9, %s7
  $region1: #{tpu_custom_call.1} parent=0
    #allocation2 [shape = 'u8[16384]{0}', space=vmem, size = 0x4000, scoped, tag = 'input window, operand 0, single buffered']
    #allocation3 [shape = 's32[1]{0}', space=sflag, size = 0x4, scoped, tag = 'scoped memory for tpu_custom_call.1']
    #allocation4 [shape = 's32[1]{0}', space=sflag, size = 0x4, scoped, tag = 'scoped memory for tpu_custom_call.1']
    #allocation5 [shape = 'u8[16384]{0}', space=vmem, size = 0x4000, scoped, tag = 'input window, operand 1, single buffered']
    #allocation6 [shape = 's32[1]{0}', space=sflag, size = 0x4, scoped, tag = 'scoped memory for tpu_custom_call.1']
    #allocation7 [shape = 'u8[16384]{0}', space=vmem, size = 0x4000, scoped, tag = 'input window, operand 2, single buffered']
    #allocation8 [shape = 'u8[16384]{0}', space=vmem, size = 0x4000, scoped, tag = 'output window, operand 0, single buffered']
    #allocation9 [shape = 'u8[16384]{0}', space=vmem, size = 0x4000, scoped, tag = 'output window, operand 1, single buffered']
    #allocation10 [shape = 's32[1]{0}', space=sflag, size = 0x4, scoped, tag = 'scoped memory for tpu_custom_call.1']
    %11 = vsyncpa [#allocation3], 0
    %12 = vsyncpa [#allocation6], 0
    %13 = vsyncpa [#allocation4], 0
    %14 = vsyncpa [#allocation10], 0
    // Predicated region
    $region2: #{tpu_custom_call.1} parent=1 // pred_check
      _
    $region3: #{tpu_custom_call.1} parent=1 // pred_check_branch
      %16 = sbr.rel (0) target = $region5
    $region4: #{tpu_custom_call.1} parent=1 // pred_region
      %s18 = ssub.s32 512, 512
      %19 = vsyncadd [#allocation3], %s18
      %s20 = sshll.u32 [#allocation2], 4
      %s21 = int_to_ptr.vmem [resolvable:$true] %s20
      %26 = dma.hbm_to_vmem [thread:$0]  %s0, 512, %s21, [#allocation3], 128, 128, 8
    $region5: #{tpu_custom_call.1} parent=1 // pred_fallthru
      _
    // Predicated region
    $region6: #{tpu_custom_call.1} parent=1 // pred_check
      _
    $region7: #{tpu_custom_call.1} parent=1 // pred_check_branch
      %28 = sbr.rel (0) target = $region9
    $region8: #{tpu_custom_call.1} parent=1 // pred_region
      %s30 = ssub.s32 512, 512
      %31 = vsyncadd [#allocation6], %s30
      %s32 = sshll.u32 [#allocation5], 4
      %s33 = int_to_ptr.vmem [resolvable:$true] %s32
      %38 = dma.hbm_to_vmem [thread:$0]  %s1, 512, %s33, [#allocation6], 128, 128, 8
    $region9: #{tpu_custom_call.1} parent=1 // pred_fallthru
      _
    // Predicated region
    $region10: #{tpu_custom_call.1} parent=1 // pred_check
      _
    $region11: #{tpu_custom_call.1} parent=1 // pred_check_branch
      %40 = sbr.rel (0) target = $region13
    $region12: #{tpu_custom_call.1} parent=1 // pred_region
      %s42 = ssub.s32 512, 512
      %43 = vsyncadd [#allocation6], %s42
      %s44 = sshll.u32 [#allocation7], 4
      %s45 = int_to_ptr.vmem [resolvable:$true] %s44
      %50 = dma.hbm_to_vmem [thread:$0]  %s2, 512, %s45, [#allocation6], 128, 128, 8
    $region13: #{tpu_custom_call.1} parent=1 // pred_fallthru
      _
    // Predicated region
    $region14: #{tpu_custom_call.1} parent=1 // pred_check
      _
    $region15: #{tpu_custom_call.1} parent=1 // pred_check_branch
      %52 = sbr.rel (0) target = $region17
    $region16: #{tpu_custom_call.1} parent=1 // pred_region
      _
    $region17: #{tpu_custom_call.1} parent=1 // pred_fallthru
      _
    // Predicated region
    $region18: #{tpu_custom_call.1} parent=1 // pred_check
      _
    $region19: #{tpu_custom_call.1} parent=1 // pred_check_branch
      %54 = sbr.rel (0) target = $region21
    $region20: #{tpu_custom_call.1} parent=1 // pred_region
      %55 = dma.done [#allocation3], 512
    $region21: #{tpu_custom_call.1} parent=1 // pred_fallthru
      _
    // Predicated region
    $region22: #{tpu_custom_call.1} parent=1 // pred_check
      _
    $region23: #{tpu_custom_call.1} parent=1 // pred_check_branch
      %57 = sbr.rel (0) target = $region25
    $region24: #{tpu_custom_call.1} parent=1 // pred_region
      %58 = dma.done [#allocation6], 512
    $region25: #{tpu_custom_call.1} parent=1 // pred_fallthru
      _
    // Predicated region
    $region26: #{tpu_custom_call.1} parent=1 // pred_check
      _
    $region27: #{tpu_custom_call.1} parent=1 // pred_check_branch
      %60 = sbr.rel (0) target = $region29
    $region28: #{tpu_custom_call.1} parent=1 // pred_region
      %61 = dma.done [#allocation6], 512
    $region29: #{tpu_custom_call.1} parent=1 // pred_fallthru
      _
    %v64 = vld [vmem:[#allocation2] sm:$0xff]
    %v65 = vld [vmem:[#allocation2 + $0x8] sm:$0xff]
    %v66 = vld [vmem:[#allocation2 + $0x10] sm:$0xff]
    %v67 = vld [vmem:[#allocation2 + $0x18] sm:$0xff]
    %v68 = vld [vmem:[#allocation5] sm:$0xff]
    %v69 = vld [vmem:[#allocation5 + $0x8] sm:$0xff]
    %v70 = vld [vmem:[#allocation5 + $0x10] sm:$0xff]
    %v71 = vld [vmem:[#allocation5 + $0x18] sm:$0xff]
    %v72 = vld [vmem:[#allocation7] sm:$0xff]
    %v73 = vld [vmem:[#allocation7 + $0x8] sm:$0xff]
    %v74 = vld [vmem:[#allocation7 + $0x10] sm:$0xff]
    %v75 = vld [vmem:[#allocation7 + $0x18] sm:$0xff]
    %v76 = vmul.f32 %v64, 0.17677669
    %v77 = vmul.f32 %v65, 0.17677669
    %v78 = vmul.f32 %v66, 0.17677669
    %v79 = vmul.f32 %v67, 0.17677669
    %vm80 = vcmask 261120
    %v82 = vsel %vm80, %v76, 0
    %v85 = vsel %vm80, %v68, 0
    %87 = vmatprep.subr.mxu0 0.0
    %88 = vmatpush1.xpose.msra.mxu0 %v85
    %89 = vmatprep.subr.mxu0 0.0
    %90 = vmatpush1.xpose.msra.mxu0 0.0
    %91 = vmatprep.subr.mxu0 0.0
    %92 = vmatpush1.xpose.msra.mxu0 0.0
    %93 = vmatprep.subr.mxu0 0.0
    %94 = vmatpush1.xpose.msra.mxu0 0.0
    %95 = vmatprep.subr.mxu0 0.0
    %96 = vmatpush1.xpose.msra.mxu0 0.0
    %97 = vmatprep.subr.mxu0 0.0
    %98 = vmatpush1.xpose.msra.mxu0 0.0
    %99 = vmatprep.subr.mxu0 0.0
    %100 = vmatpush1.xpose.msra.mxu0 0.0
    %101 = vmatprep.subr.mxu0 0.0
    %102 = vmatpush1.xpose.msra.mxu0 0.0
    %103 = vmatprep.subr.mxu0 0.0
    %104 = vmatpush1.xpose.msra.mxu0 0.0
    %105 = vmatprep.subr.mxu0 0.0
    %106 = vmatpush1.xpose.msra.mxu0 0.0
    %107 = vmatprep.subr.mxu0 0.0
    %108 = vmatpush1.xpose.msra.mxu0 0.0
    %109 = vmatprep.subr.mxu0 0.0
    %110 = vmatpush1.xpose.msra.mxu0 0.0
    %111 = vmatprep.subr.mxu0 0.0
    %112 = vmatpush1.xpose.msra.mxu0 0.0
    %113 = vmatprep.subr.mxu0 0.0
    %114 = vmatpush1.xpose.msra.mxu0 0.0
    %115 = vmatprep.subr.mxu0 0.0
    %116 = vmatpush1.xpose.msra.mxu0 0.0
    %117 = vmatprep.subr.mxu0 0.0
    %118 = vmatpush1.xpose.msra.mxu0 0.0
    %119 = vmatprep.subr.mxu0 0.0
    %120 = vmatpush1.xpose.msra.mxu0 0.0
    %121 = vmatprep.subr.mxu0 0.0
    %122 = vmatpush1.xpose.msra.mxu0 0.0
    %123 = vmatprep.subr.mxu0 0.0
    %124 = vmatpush1.xpose.msra.mxu0 0.0
    %125 = vmatprep.subr.mxu0 0.0
    %126 = vmatpush1.xpose.msra.mxu0 0.0
    %127 = vmatprep.subr.mxu0 0.0
    %128 = vmatpush1.xpose.msra.mxu0 0.0
    %129 = vmatprep.subr.mxu0 0.0
    %130 = vmatpush1.xpose.msra.mxu0 0.0
    %131 = vmatprep.subr.mxu0 0.0
    %132 = vmatpush1.xpose.msra.mxu0 0.0
    %133 = vmatprep.subr.mxu0 0.0
    %134 = vmatpush1.xpose.msra.mxu0 0.0
    %135 = vmatprep.subr.mxu0 0.0
    %136 = vmatpush1.xpose.msra.mxu0 0.0
    %137 = vmatprep.subr.mxu0 0.0
    %138 = vmatpush1.xpose.msra.mxu0 0.0
    %139 = vmatprep.subr.mxu0 0.0
    %140 = vmatpush1.xpose.msra.mxu0 0.0
    %141 = vmatprep.subr.mxu0 0.0
    %142 = vmatpush1.xpose.msra.mxu0 0.0
    %143 = vmatprep.subr.mxu0 0.0
    %144 = vmatpush1.xpose.msra.mxu0 0.0
    %145 = vmatprep.subr.mxu0 0.0
    %146 = vmatpush1.xpose.msra.mxu0 0.0
    %147 = vmatprep.subr.mxu0 0.0
    %148 = vmatpush1.xpose.msra.mxu0 0.0
    %149 = vmatprep.subr.mxu0 0.0
    %150 = vmatpush1.xpose.msra.mxu0 0.0
    %151 = vmatprep.mubr.f32.mxu0 0.0
    %152 = vmatmul.mubr.f32.gmra.mrb[0].mxu0 %v82
    %v153 = vpop.f32.mrb[0].mxu0
    %v154 = vadd.f32 0.0, %v153
    %v155 = vpop.f32.mrb[0].mxu0
    %156 = vdwg.mxu0
    %v158 = vsel %vm80, %v77, 0
    %v161 = vsel %vm80, %v69, 0
    %163 = vmatprep.subr.mxu0 0.0
    %164 = vmatpush1.xpose.msra.mxu0 %v161
    %165 = vmatprep.subr.mxu0 0.0
    %166 = vmatpush1.xpose.msra.mxu0 0.0
    %167 = vmatprep.subr.mxu0 0.0
    %168 = vmatpush1.xpose.msra.mxu0 0.0
    %169 = vmatprep.subr.mxu0 0.0
    %170 = vmatpush1.xpose.msra.mxu0 0.0
    %171 = vmatprep.subr.mxu0 0.0
    %172 = vmatpush1.xpose.msra.mxu0 0.0
    %173 = vmatprep.subr.mxu0 0.0
    %174 = vmatpush1.xpose.msra.mxu0 0.0
    %175 = vmatprep.subr.mxu0 0.0
    %176 = vmatpush1.xpose.msra.mxu0 0.0
    %177 = vmatprep.subr.mxu0 0.0
    %178 = vmatpush1.xpose.msra.mxu0 0.0
    %179 = vmatprep.subr.mxu0 0.0
    %180 = vmatpush1.xpose.msra.mxu0 0.0
    %181 = vmatprep.subr.mxu0 0.0
    %182 = vmatpush1.xpose.msra.mxu0 0.0
    %183 = vmatprep.subr.mxu0 0.0
    %184 = vmatpush1.xpose.msra.mxu0 0.0
    %185 = vmatprep.subr.mxu0 0.0
    %186 = vmatpush1.xpose.msra.mxu0 0.0
    %187 = vmatprep.subr.mxu0 0.0
    %188 = vmatpush1.xpose.msra.mxu0 0.0
    %189 = vmatprep.subr.mxu0 0.0
    %190 = vmatpush1.xpose.msra.mxu0 0.0
    %191 = vmatprep.subr.mxu0 0.0
    %192 = vmatpush1.xpose.msra.mxu0 0.0
    %193 = vmatprep.subr.mxu0 0.0
    %194 = vmatpush1.xpose.msra.mxu0 0.0
    %195 = vmatprep.subr.mxu0 0.0
    %196 = vmatpush1.xpose.msra.mxu0 0.0
    %197 = vmatprep.subr.mxu0 0.0
    %198 = vmatpush1.xpose.msra.mxu0 0.0
    %199 = vmatprep.subr.mxu0 0.0
    %200 = vmatpush1.xpose.msra.mxu0 0.0
    %201 = vmatprep.subr.mxu0 0.0
    %202 = vmatpush1.xpose.msra.mxu0 0.0
    %203 = vmatprep.subr.mxu0 0.0
    %204 = vmatpush1.xpose.msra.mxu0 0.0
    %205 = vmatprep.subr.mxu0 0.0
    %206 = vmatpush1.xpose.msra.mxu0 0.0
    %207 = vmatprep.subr.mxu0 0.0
    %208 = vmatpush1.xpose.msra.mxu0 0.0
    %209 = vmatprep.subr.mxu0 0.0
    %210 = vmatpush1.xpose.msra.mxu0 0.0
    %211 = vmatprep.subr.mxu0 0.0
    %212 = vmatpush1.xpose.msra.mxu0 0.0
    %213 = vmatprep.subr.mxu0 0.0
    %214 = vmatpush1.xpose.msra.mxu0 0.0
    %215 = vmatprep.subr.mxu0 0.0
    %216 = vmatpush1.xpose.msra.mxu0 0.0
    %217 = vmatprep.subr.mxu0 0.0
    %218 = vmatpush1.xpose.msra.mxu0 0.0
    %219 = vmatprep.subr.mxu0 0.0
    %220 = vmatpush1.xpose.msra.mxu0 0.0
    %221 = vmatprep.subr.mxu0 0.0
    %222 = vmatpush1.xpose.msra.mxu0 0.0
    %223 = vmatprep.subr.mxu0 0.0
    %224 = vmatpush1.xpose.msra.mxu0 0.0
    %225 = vmatprep.subr.mxu0 0.0
    %226 = vmatpush1.xpose.msra.mxu0 0.0
    %227 = vmatprep.mubr.f32.mxu0 0.0
    %228 = vmatmul.mubr.f32.gmra.mrb[0].mxu0 %v158
    %v229 = vpop.f32.mrb[0].mxu0
    %v230 = vadd.f32 0.0, %v229
    %v231 = vpop.f32.mrb[0].mxu0
    %232 = vdwg.mxu0
    %v234 = vsel %vm80, %v78, 0
    %v237 = vsel %vm80, %v70, 0
    %239 = vmatprep.subr.mxu0 0.0
    %240 = vmatpush1.xpose.msra.mxu0 %v237
    %241 = vmatprep.subr.mxu0 0.0
    %242 = vmatpush1.xpose.msra.mxu0 0.0
    %243 = vmatprep.subr.mxu0 0.0
    %244 = vmatpush1.xpose.msra.mxu0 0.0
    %245 = vmatprep.subr.mxu0 0.0
    %246 = vmatpush1.xpose.msra.mxu0 0.0
    %247 = vmatprep.subr.mxu0 0.0
    %248 = vmatpush1.xpose.msra.mxu0 0.0
    %249 = vmatprep.subr.mxu0 0.0
    %250 = vmatpush1.xpose.msra.mxu0 0.0
    %251 = vmatprep.subr.mxu0 0.0
    %252 = vmatpush1.xpose.msra.mxu0 0.0
    %253 = vmatprep.subr.mxu0 0.0
    %254 = vmatpush1.xpose.msra.mxu0 0.0
    %255 = vmatprep.subr.mxu0 0.0
    %256 = vmatpush1.xpose.msra.mxu0 0.0
    %257 = vmatprep.subr.mxu0 0.0
    %258 = vmatpush1.xpose.msra.mxu0 0.0
    %259 = vmatprep.subr.mxu0 0.0
    %260 = vmatpush1.xpose.msra.mxu0 0.0
    %261 = vmatprep.subr.mxu0 0.0
    %262 = vmatpush1.xpose.msra.mxu0 0.0
    %263 = vmatprep.subr.mxu0 0.0
    %264 = vmatpush1.xpose.msra.mxu0 0.0
    %265 = vmatprep.subr.mxu0 0.0
    %266 = vmatpush1.xpose.msra.mxu0 0.0
    %267 = vmatprep.subr.mxu0 0.0
    %268 = vmatpush1.xpose.msra.mxu0 0.0
    %269 = vmatprep.subr.mxu0 0.0
    %270 = vmatpush1.xpose.msra.mxu0 0.0
    %271 = vmatprep.subr.mxu0 0.0
    %272 = vmatpush1.xpose.msra.mxu0 0.0
    %273 = vmatprep.subr.mxu0 0.0
    %274 = vmatpush1.xpose.msra.mxu0 0.0
    %275 = vmatprep.subr.mxu0 0.0
    %276 = vmatpush1.xpose.msra.mxu0 0.0
    %277 = vmatprep.subr.mxu0 0.0
    %278 = vmatpush1.xpose.msra.mxu0 0.0
    %279 = vmatprep.subr.mxu0 0.0
    %280 = vmatpush1.xpose.msra.mxu0 0.0
    %281 = vmatprep.subr.mxu0 0.0
    %282 = vmatpush1.xpose.msra.mxu0 0.0
    %283 = vmatprep.subr.mxu0 0.0
    %284 = vmatpush1.xpose.msra.mxu0 0.0
    %285 = vmatprep.subr.mxu0 0.0
    %286 = vmatpush1.xpose.msra.mxu0 0.0
    %287 = vmatprep.subr.mxu0 0.0
    %288 = vmatpush1.xpose.msra.mxu0 0.0
    %289 = vmatprep.subr.mxu0 0.0
    %290 = vmatpush1.xpose.msra.mxu0 0.0
    %291 = vmatprep.subr.mxu0 0.0
    %292 = vmatpush1.xpose.msra.mxu0 0.0
    %293 = vmatprep.subr.mxu0 0.0
    %294 = vmatpush1.xpose.msra.mxu0 0.0
    %295 = vmatprep.subr.mxu0 0.0
    %296 = vmatpush1.xpose.msra.mxu0 0.0
    %297 = vmatprep.subr.mxu0 0.0
    %298 = vmatpush1.xpose.msra.mxu0 0.0
    %299 = vmatprep.subr.mxu0 0.0
    %300 = vmatpush1.xpose.msra.mxu0 0.0
    %301 = vmatprep.subr.mxu0 0.0
    %302 = vmatpush1.xpose.msra.mxu0 0.0
    %303 = vmatprep.mubr.f32.mxu0 0.0
    %304 = vmatmul.mubr.f32.gmra.mrb[0].mxu0 %v234
    %v305 = vpop.f32.mrb[0].mxu0
    %v306 = vadd.f32 0.0, %v305
    %v307 = vpop.f32.mrb[0].mxu0
    %308 = vdwg.mxu0
    %v310 = vsel %vm80, %v79, 0
    %v313 = vsel %vm80, %v71, 0
    %315 = vmatprep.subr.mxu0 0.0
    %316 = vmatpush1.xpose.msra.mxu0 %v313
    %317 = vmatprep.subr.mxu0 0.0
    %318 = vmatpush1.xpose.msra.mxu0 0.0
    %319 = vmatprep.subr.mxu0 0.0
    %320 = vmatpush1.xpose.msra.mxu0 0.0
    %321 = vmatprep.subr.mxu0 0.0
    %322 = vmatpush1.xpose.msra.mxu0 0.0
    %323 = vmatprep.subr.mxu0 0.0
    %324 = vmatpush1.xpose.msra.mxu0 0.0
    %325 = vmatprep.subr.mxu0 0.0
    %326 = vmatpush1.xpose.msra.mxu0 0.0
    %327 = vmatprep.subr.mxu0 0.0
    %328 = vmatpush1.xpose.msra.mxu0 0.0
    %329 = vmatprep.subr.mxu0 0.0
    %330 = vmatpush1.xpose.msra.mxu0 0.0
    %331 = vmatprep.subr.mxu0 0.0
    %332 = vmatpush1.xpose.msra.mxu0 0.0
    %333 = vmatprep.subr.mxu0 0.0
    %334 = vmatpush1.xpose.msra.mxu0 0.0
    %335 = vmatprep.subr.mxu0 0.0
    %336 = vmatpush1.xpose.msra.mxu0 0.0
    %337 = vmatprep.subr.mxu0 0.0
    %338 = vmatpush1.xpose.msra.mxu0 0.0
    %339 = vmatprep.subr.mxu0 0.0
    %340 = vmatpush1.xpose.msra.mxu0 0.0
    %341 = vmatprep.subr.mxu0 0.0
    %342 = vmatpush1.xpose.msra.mxu0 0.0
    %343 = vmatprep.subr.mxu0 0.0
    %344 = vmatpush1.xpose.msra.mxu0 0.0
    %345 = vmatprep.subr.mxu0 0.0
    %346 = vmatpush1.xpose.msra.mxu0 0.0
    %347 = vmatprep.subr.mxu0 0.0
    %348 = vmatpush1.xpose.msra.mxu0 0.0
    %349 = vmatprep.subr.mxu0 0.0
    %350 = vmatpush1.xpose.msra.mxu0 0.0
    %351 = vmatprep.subr.mxu0 0.0
    %352 = vmatpush1.xpose.msra.mxu0 0.0
    %353 = vmatprep.subr.mxu0 0.0
    %354 = vmatpush1.xpose.msra.mxu0 0.0
    %355 = vmatprep.subr.mxu0 0.0
    %356 = vmatpush1.xpose.msra.mxu0 0.0
    %357 = vmatprep.subr.mxu0 0.0
    %358 = vmatpush1.xpose.msra.mxu0 0.0
    %359 = vmatprep.subr.mxu0 0.0
    %360 = vmatpush1.xpose.msra.mxu0 0.0
    %361 = vmatprep.subr.mxu0 0.0
    %362 = vmatpush1.xpose.msra.mxu0 0.0
    %363 = vmatprep.subr.mxu0 0.0
    %364 = vmatpush1.xpose.msra.mxu0 0.0
    %365 = vmatprep.subr.mxu0 0.0
    %366 = vmatpush1.xpose.msra.mxu0 0.0
    %367 = vmatprep.subr.mxu0 0.0
    %368 = vmatpush1.xpose.msra.mxu0 0.0
    %369 = vmatprep.subr.mxu0 0.0
    %370 = vmatpush1.xpose.msra.mxu0 0.0
    %371 = vmatprep.subr.mxu0 0.0
    %372 = vmatpush1.xpose.msra.mxu0 0.0
    %373 = vmatprep.subr.mxu0 0.0
    %374 = vmatpush1.xpose.msra.mxu0 0.0
    %375 = vmatprep.subr.mxu0 0.0
    %376 = vmatpush1.xpose.msra.mxu0 0.0
    %377 = vmatprep.subr.mxu0 0.0
    %378 = vmatpush1.xpose.msra.mxu0 0.0
    %379 = vmatprep.mubr.f32.mxu0 0.0
    %380 = vmatmul.mubr.f32.gmra.mrb[0].mxu0 %v310
    %v381 = vpop.f32.mrb[0].mxu0
    %v382 = vadd.f32 0.0, %v381
    %v383 = vpop.f32.mrb[0].mxu0
    %384 = vdwg.mxu0
    %v385 = vld [vmem:[%s3] sm:$0x3]
    %vm386 = vnez %v385
    %v387 = vsel %vm386, 16843009, 0
    %v388 = vunpack.c.0.s8 %v387
    %vm389 = vcmp.ne.s32.totalorder %v388, 0
    %v390 = vsel %vm389, 1, 0
    %vm391 = vcmp.eq.s32.totalorder %v390, 1
    %v392 = vsel %vm391, -1e+09, %v154
    %v393 = vsel %vm391, -1e+09, %v230
    %v394 = vsel %vm391, -1e+09, %v306
    %v395 = vsel %vm391, -1e+09, %v382
    %vm396 = vcmask 64512
    %v397 = vsel %vm396, %v392, -inf
    %398 = vmax.xlane.f32.xlu0 %v397
    %v399 = vpop.xlane.xlu0 %398
    %v400 = vsel %vm396, %v393, -inf
    %401 = vmax.xlane.f32.xlu0 %v400
    %v402 = vpop.xlane.xlu0 %401
    %v403 = vsel %vm396, %v394, -inf
    %404 = vmax.xlane.f32.xlu0 %v403
    %v405 = vpop.xlane.xlu0 %404
    %v406 = vsel %vm396, %v395, -inf
    %407 = vmax.xlane.f32.xlu0 %v406
    %v408 = vpop.xlane.xlu0 %407
    %v409 = vsub.f32 %v392, %v399
    %v410 = vsub.f32 %v393, %v402
    %v411 = vsub.f32 %v394, %v405
    %v412 = vsub.f32 %v395, %v408
    %v413 = vmul.f32 %v409, 1.442695
    %v414 = vpow.pop %v413
    %v415 = vmul.f32 %v410, 1.442695
    %v416 = vpow.pop %v415
    %v417 = vmul.f32 %v411, 1.442695
    %v418 = vpow.pop %v417
    %v419 = vmul.f32 %v412, 1.442695
    %v420 = vpow.pop %v419
    %v421 = vsel %vm396, %v414, 0.0
    %422 = vadd.xlane.f32.xlu0 %v421
    %v423 = vpop.xlane.xlu0 %422
    %v424 = vsel %vm396, %v416, 0.0
    %425 = vadd.xlane.f32.xlu0 %v424
    %v426 = vpop.xlane.xlu0 %425
    %v427 = vsel %vm396, %v418, 0.0
    %428 = vadd.xlane.f32.xlu0 %v427
    %v429 = vpop.xlane.xlu0 %428
    %v430 = vsel %vm396, %v420, 0.0
    %431 = vadd.xlane.f32.xlu0 %v430
    %v432 = vpop.xlane.xlu0 %431
    %v433 = vrcp.pop %v423
    %v434 = vrcp.pop %v426
    %v435 = vrcp.pop %v429
    %v436 = vrcp.pop %v432
    %v437 = vmul.f32 %v414, %v433
    %v438 = vmul.f32 %v416, %v434
    %v439 = vmul.f32 %v418, %v435
    %v440 = vmul.f32 %v420, %v436
    %v442 = vsel %vm396, %v437, 0
    %444 = vmatprep.subr.mxu0 0.0
    %445 = vmatpush1.msra.mxu0 %v72
    %446 = vmatprep.subr.mxu0 0.0
    %447 = vmatpush1.msra.mxu0 0.0
    %448 = vmatprep.subr.mxu0 0.0
    %449 = vmatpush1.msra.mxu0 0.0
    %450 = vmatprep.subr.mxu0 0.0
    %451 = vmatpush1.msra.mxu0 0.0
    %452 = vmatprep.subr.mxu0 0.0
    %453 = vmatpush1.msra.mxu0 0.0
    %454 = vmatprep.subr.mxu0 0.0
    %455 = vmatpush1.msra.mxu0 0.0
    %456 = vmatprep.subr.mxu0 0.0
    %457 = vmatpush1.msra.mxu0 0.0
    %458 = vmatprep.subr.mxu0 0.0
    %459 = vmatpush1.msra.mxu0 0.0
    %460 = vmatprep.subr.mxu0 0.0
    %461 = vmatpush1.msra.mxu0 0.0
    %462 = vmatprep.subr.mxu0 0.0
    %463 = vmatpush1.msra.mxu0 0.0
    %464 = vmatprep.subr.mxu0 0.0
    %465 = vmatpush1.msra.mxu0 0.0
    %466 = vmatprep.subr.mxu0 0.0
    %467 = vmatpush1.msra.mxu0 0.0
    %468 = vmatprep.subr.mxu0 0.0
    %469 = vmatpush1.msra.mxu0 0.0
    %470 = vmatprep.subr.mxu0 0.0
    %471 = vmatpush1.msra.mxu0 0.0
    %472 = vmatprep.subr.mxu0 0.0
    %473 = vmatpush1.msra.mxu0 0.0
    %474 = vmatprep.subr.mxu0 0.0
    %475 = vmatpush1.msra.mxu0 0.0
    %476 = vmatprep.subr.mxu0 0.0
    %477 = vmatpush1.msra.mxu0 0.0
    %478 = vmatprep.subr.mxu0 0.0
    %479 = vmatpush1.msra.mxu0 0.0
    %480 = vmatprep.subr.mxu0 0.0
    %481 = vmatpush1.msra.mxu0 0.0
    %482 = vmatprep.subr.mxu0 0.0
    %483 = vmatpush1.msra.mxu0 0.0
    %484 = vmatprep.subr.mxu0 0.0
    %485 = vmatpush1.msra.mxu0 0.0
    %486 = vmatprep.subr.mxu0 0.0
    %487 = vmatpush1.msra.mxu0 0.0
    %488 = vmatprep.subr.mxu0 0.0
    %489 = vmatpush1.msra.mxu0 0.0
    %490 = vmatprep.subr.mxu0 0.0
    %491 = vmatpush1.msra.mxu0 0.0
    %492 = vmatprep.subr.mxu0 0.0
    %493 = vmatpush1.msra.mxu0 0.0
    %494 = vmatprep.subr.mxu0 0.0
    %495 = vmatpush1.msra.mxu0 0.0
    %496 = vmatprep.subr.mxu0 0.0
    %497 = vmatpush1.msra.mxu0 0.0
    %498 = vmatprep.subr.mxu0 0.0
    %499 = vmatpush1.msra.mxu0 0.0
    %500 = vmatprep.subr.mxu0 0.0
    %501 = vmatpush1.msra.mxu0 0.0
    %502 = vmatprep.subr.mxu0 0.0
    %503 = vmatpush1.msra.mxu0 0.0
    %504 = vmatprep.subr.mxu0 0.0
    %505 = vmatpush1.msra.mxu0 0.0
    %506 = vmatprep.subr.mxu0 0.0
    %507 = vmatpush1.msra.mxu0 0.0
    %508 = vmatprep.mubr.f32.mxu0 0.0
    %509 = vmatmul.mubr.f32.gmra.mrb[0].mxu0 %v442
    %v510 = vpop.f32.mrb[0].mxu0
    %v511 = vadd.f32 0.0, %v510
    %v512 = vpop.f32.mrb[0].mxu0
    %513 = vdwg.mxu0
    %v515 = vsel %vm396, %v438, 0
    %517 = vmatprep.subr.mxu0 0.0
    %518 = vmatpush1.msra.mxu0 %v73
    %519 = vmatprep.subr.mxu0 0.0
    %520 = vmatpush1.msra.mxu0 0.0
    %521 = vmatprep.subr.mxu0 0.0
    %522 = vmatpush1.msra.mxu0 0.0
    %523 = vmatprep.subr.mxu0 0.0
    %524 = vmatpush1.msra.mxu0 0.0
    %525 = vmatprep.subr.mxu0 0.0
    %526 = vmatpush1.msra.mxu0 0.0
    %527 = vmatprep.subr.mxu0 0.0
    %528 = vmatpush1.msra.mxu0 0.0
    %529 = vmatprep.subr.mxu0 0.0
    %530 = vmatpush1.msra.mxu0 0.0
    %531 = vmatprep.subr.mxu0 0.0
    %532 = vmatpush1.msra.mxu0 0.0
    %533 = vmatprep.subr.mxu0 0.0
    %534 = vmatpush1.msra.mxu0 0.0
    %535 = vmatprep.subr.mxu0 0.0
    %536 = vmatpush1.msra.mxu0 0.0
    %537 = vmatprep.subr.mxu0 0.0
    %538 = vmatpush1.msra.mxu0 0.0
    %539 = vmatprep.subr.mxu0 0.0
    %540 = vmatpush1.msra.mxu0 0.0
    %541 = vmatprep.subr.mxu0 0.0
    %542 = vmatpush1.msra.mxu0 0.0
    %543 = vmatprep.subr.mxu0 0.0
    %544 = vmatpush1.msra.mxu0 0.0
    %545 = vmatprep.subr.mxu0 0.0
    %546 = vmatpush1.msra.mxu0 0.0
    %547 = vmatprep.subr.mxu0 0.0
    %548 = vmatpush1.msra.mxu0 0.0
    %549 = vmatprep.subr.mxu0 0.0
    %550 = vmatpush1.msra.mxu0 0.0
    %551 = vmatprep.subr.mxu0 0.0
    %552 = vmatpush1.msra.mxu0 0.0
    %553 = vmatprep.subr.mxu0 0.0
    %554 = vmatpush1.msra.mxu0 0.0
    %555 = vmatprep.subr.mxu0 0.0
    %556 = vmatpush1.msra.mxu0 0.0
    %557 = vmatprep.subr.mxu0 0.0
    %558 = vmatpush1.msra.mxu0 0.0
    %559 = vmatprep.subr.mxu0 0.0
    %560 = vmatpush1.msra.mxu0 0.0
    %561 = vmatprep.subr.mxu0 0.0
    %562 = vmatpush1.msra.mxu0 0.0
    %563 = vmatprep.subr.mxu0 0.0
    %564 = vmatpush1.msra.mxu0 0.0
    %565 = vmatprep.subr.mxu0 0.0
    %566 = vmatpush1.msra.mxu0 0.0
    %567 = vmatprep.subr.mxu0 0.0
    %568 = vmatpush1.msra.mxu0 0.0
    %569 = vmatprep.subr.mxu0 0.0
    %570 = vmatpush1.msra.mxu0 0.0
    %571 = vmatprep.subr.mxu0 0.0
    %572 = vmatpush1.msra.mxu0 0.0
    %573 = vmatprep.subr.mxu0 0.0
    %574 = vmatpush1.msra.mxu0 0.0
    %575 = vmatprep.subr.mxu0 0.0
    %576 = vmatpush1.msra.mxu0 0.0
    %577 = vmatprep.subr.mxu0 0.0
    %578 = vmatpush1.msra.mxu0 0.0
    %579 = vmatprep.subr.mxu0 0.0
    %580 = vmatpush1.msra.mxu0 0.0
    %581 = vmatprep.mubr.f32.mxu0 0.0
    %582 = vmatmul.mubr.f32.gmra.mrb[0].mxu0 %v515
    %v583 = vpop.f32.mrb[0].mxu0
    %v584 = vadd.f32 0.0, %v583
    %v585 = vpop.f32.mrb[0].mxu0
    %586 = vdwg.mxu0
    %v588 = vsel %vm396, %v439, 0
    %590 = vmatprep.subr.mxu0 0.0
    %591 = vmatpush1.msra.mxu0 %v74
    %592 = vmatprep.subr.mxu0 0.0
    %593 = vmatpush1.msra.mxu0 0.0
    %594 = vmatprep.subr.mxu0 0.0
    %595 = vmatpush1.msra.mxu0 0.0
    %596 = vmatprep.subr.mxu0 0.0
    %597 = vmatpush1.msra.mxu0 0.0
    %598 = vmatprep.subr.mxu0 0.0
    %599 = vmatpush1.msra.mxu0 0.0
    %600 = vmatprep.subr.mxu0 0.0
    %601 = vmatpush1.msra.mxu0 0.0
    %602 = vmatprep.subr.mxu0 0.0
    %603 = vmatpush1.msra.mxu0 0.0
    %604 = vmatprep.subr.mxu0 0.0
    %605 = vmatpush1.msra.mxu0 0.0
    %606 = vmatprep.subr.mxu0 0.0
    %607 = vmatpush1.msra.mxu0 0.0
    %608 = vmatprep.subr.mxu0 0.0
    %609 = vmatpush1.msra.mxu0 0.0
    %610 = vmatprep.subr.mxu0 0.0
    %611 = vmatpush1.msra.mxu0 0.0
    %612 = vmatprep.subr.mxu0 0.0
    %613 = vmatpush1.msra.mxu0 0.0
    %614 = vmatprep.subr.mxu0 0.0
    %615 = vmatpush1.msra.mxu0 0.0
    %616 = vmatprep.subr.mxu0 0.0
    %617 = vmatpush1.msra.mxu0 0.0
    %618 = vmatprep.subr.mxu0 0.0
    %619 = vmatpush1.msra.mxu0 0.0
    %620 = vmatprep.subr.mxu0 0.0
    %621 = vmatpush1.msra.mxu0 0.0
    %622 = vmatprep.subr.mxu0 0.0
    %623 = vmatpush1.msra.mxu0 0.0
    %624 = vmatprep.subr.mxu0 0.0
    %625 = vmatpush1.msra.mxu0 0.0
    %626 = vmatprep.subr.mxu0 0.0
    %627 = vmatpush1.msra.mxu0 0.0
    %628 = vmatprep.subr.mxu0 0.0
    %629 = vmatpush1.msra.mxu0 0.0
    %630 = vmatprep.subr.mxu0 0.0
    %631 = vmatpush1.msra.mxu0 0.0
    %632 = vmatprep.subr.mxu0 0.0
    %633 = vmatpush1.msra.mxu0 0.0
    %634 = vmatprep.subr.mxu0 0.0
    %635 = vmatpush1.msra.mxu0 0.0
    %636 = vmatprep.subr.mxu0 0.0
    %637 = vmatpush1.msra.mxu0 0.0
    %638 = vmatprep.subr.mxu0 0.0
    %639 = vmatpush1.msra.mxu0 0.0
    %640 = vmatprep.subr.mxu0 0.0
    %641 = vmatpush1.msra.mxu0 0.0
    %642 = vmatprep.subr.mxu0 0.0
    %643 = vmatpush1.msra.mxu0 0.0
    %644 = vmatprep.subr.mxu0 0.0
    %645 = vmatpush1.msra.mxu0 0.0
    %646 = vmatprep.subr.mxu0 0.0
    %647 = vmatpush1.msra.mxu0 0.0
    %648 = vmatprep.subr.mxu0 0.0
    %649 = vmatpush1.msra.mxu0 0.0
    %650 = vmatprep.subr.mxu0 0.0
    %651 = vmatpush1.msra.mxu0 0.0
    %652 = vmatprep.subr.mxu0 0.0
    %653 = vmatpush1.msra.mxu0 0.0
    %654 = vmatprep.mubr.f32.mxu0 0.0
    %655 = vmatmul.mubr.f32.gmra.mrb[0].mxu0 %v588
    %v656 = vpop.f32.mrb[0].mxu0
    %v657 = vadd.f32 0.0, %v656
    %v658 = vpop.f32.mrb[0].mxu0
    %659 = vdwg.mxu0
    %v661 = vsel %vm396, %v440, 0
    %663 = vmatprep.subr.mxu0 0.0
    %664 = vmatpush1.msra.mxu0 %v75
    %665 = vmatprep.subr.mxu0 0.0
    %666 = vmatpush1.msra.mxu0 0.0
    %667 = vmatprep.subr.mxu0 0.0
    %668 = vmatpush1.msra.mxu0 0.0
    %669 = vmatprep.subr.mxu0 0.0
    %670 = vmatpush1.msra.mxu0 0.0
    %671 = vmatprep.subr.mxu0 0.0
    %672 = vmatpush1.msra.mxu0 0.0
    %673 = vmatprep.subr.mxu0 0.0
    %674 = vmatpush1.msra.mxu0 0.0
    %675 = vmatprep.subr.mxu0 0.0
    %676 = vmatpush1.msra.mxu0 0.0
    %677 = vmatprep.subr.mxu0 0.0
    %678 = vmatpush1.msra.mxu0 0.0
    %679 = vmatprep.subr.mxu0 0.0
    %680 = vmatpush1.msra.mxu0 0.0
    %681 = vmatprep.subr.mxu0 0.0
    %682 = vmatpush1.msra.mxu0 0.0
    %683 = vmatprep.subr.mxu0 0.0
    %684 = vmatpush1.msra.mxu0 0.0
    %685 = vmatprep.subr.mxu0 0.0
    %686 = vmatpush1.msra.mxu0 0.0
    %687 = vmatprep.subr.mxu0 0.0
    %688 = vmatpush1.msra.mxu0 0.0
    %689 = vmatprep.subr.mxu0 0.0
    %690 = vmatpush1.msra.mxu0 0.0
    %691 = vmatprep.subr.mxu0 0.0
    %692 = vmatpush1.msra.mxu0 0.0
    %693 = vmatprep.subr.mxu0 0.0
    %694 = vmatpush1.msra.mxu0 0.0
    %695 = vmatprep.subr.mxu0 0.0
    %696 = vmatpush1.msra.mxu0 0.0
    %697 = vmatprep.subr.mxu0 0.0
    %698 = vmatpush1.msra.mxu0 0.0
    %699 = vmatprep.subr.mxu0 0.0
    %700 = vmatpush1.msra.mxu0 0.0
    %701 = vmatprep.subr.mxu0 0.0
    %702 = vmatpush1.msra.mxu0 0.0
    %703 = vmatprep.subr.mxu0 0.0
    %704 = vmatpush1.msra.mxu0 0.0
    %705 = vmatprep.subr.mxu0 0.0
    %706 = vmatpush1.msra.mxu0 0.0
    %707 = vmatprep.subr.mxu0 0.0
    %708 = vmatpush1.msra.mxu0 0.0
    %709 = vmatprep.subr.mxu0 0.0
    %710 = vmatpush1.msra.mxu0 0.0
    %711 = vmatprep.subr.mxu0 0.0
    %712 = vmatpush1.msra.mxu0 0.0
    %713 = vmatprep.subr.mxu0 0.0
    %714 = vmatpush1.msra.mxu0 0.0
    %715 = vmatprep.subr.mxu0 0.0
    %716 = vmatpush1.msra.mxu0 0.0
    %717 = vmatprep.subr.mxu0 0.0
    %718 = vmatpush1.msra.mxu0 0.0
    %719 = vmatprep.subr.mxu0 0.0
    %720 = vmatpush1.msra.mxu0 0.0
    %721 = vmatprep.subr.mxu0 0.0
    %722 = vmatpush1.msra.mxu0 0.0
    %723 = vmatprep.subr.mxu0 0.0
    %724 = vmatpush1.msra.mxu0 0.0
    %725 = vmatprep.subr.mxu0 0.0
    %726 = vmatpush1.msra.mxu0 0.0
    %727 = vmatprep.mubr.f32.mxu0 0.0
    %728 = vmatmul.mubr.f32.gmra.mrb[0].mxu0 %v661
    %v729 = vpop.f32.mrb[0].mxu0
    %v730 = vadd.f32 0.0, %v729
    %v731 = vpop.f32.mrb[0].mxu0
    %732 = vdwg.mxu0
    %733 = vst.msk [vmem:[#allocation8] sm:$0xff] %vm80, %v511
    %734 = vst.msk [vmem:[#allocation8 + $0x8] sm:$0xff] %vm80, %v584
    %735 = vst.msk [vmem:[#allocation8 + $0x10] sm:$0xff] %vm80, %v657
    %736 = vst.msk [vmem:[#allocation8 + $0x18] sm:$0xff] %vm80, %v730
    %737 = vst.msk [vmem:[#allocation9] sm:$0xff] %vm396, %v437
    %738 = vst.msk [vmem:[#allocation9 + $0x8] sm:$0xff] %vm396, %v438
    %739 = vst.msk [vmem:[#allocation9 + $0x10] sm:$0xff] %vm396, %v439
    %740 = vst.msk [vmem:[#allocation9 + $0x18] sm:$0xff] %vm396, %v440
    // Predicated region
    $region30: #{tpu_custom_call.1} parent=1 // pred_check
      _
    $region31: #{tpu_custom_call.1} parent=1 // pred_check_branch
      %742 = sbr.rel (0) target = $region33
    $region32: #{tpu_custom_call.1} parent=1 // pred_region
      %s744 = ssub.s32 512, 512
      %745 = vsyncadd [#allocation4], %s744
      %s746 = sshll.u32 [#allocation8], 4
      %s747 = int_to_ptr.vmem [resolvable:$true] %s746
      %752 = dma.vmem_to_hbm [thread:$0]  %s747, 512, %s4, [#allocation4], 128, 128, 8
    $region33: #{tpu_custom_call.1} parent=1 // pred_fallthru
      _
    // Predicated region
    $region34: #{tpu_custom_call.1} parent=1 // pred_check
      _
    $region35: #{tpu_custom_call.1} parent=1 // pred_check_branch
      %754 = sbr.rel (0) target = $region37
    $region36: #{tpu_custom_call.1} parent=1 // pred_region
      %s756 = ssub.s32 512, 512
      %757 = vsyncadd [#allocation10], %s756
      %s758 = sshll.u32 [#allocation9], 4
      %s759 = int_to_ptr.vmem [resolvable:$true] %s758
      %764 = dma.vmem_to_hbm [thread:$0]  %s759, 512, %s5, [#allocation10], 128, 128, 8
    $region37: #{tpu_custom_call.1} parent=1 // pred_fallthru
      _
    // Predicated region
    $region38: #{tpu_custom_call.1} parent=1 // pred_check
      _
    $region39: #{tpu_custom_call.1} parent=1 // pred_check_branch
      %766 = sbr.rel (0) target = $region41
    $region40: #{tpu_custom_call.1} parent=1 // pred_region
      %767 = dma.done [#allocation4], 512
    $region41: #{tpu_custom_call.1} parent=1 // pred_fallthru
      _
    // Predicated region
    $region42: #{tpu_custom_call.1} parent=1 // pred_check
      _
    $region43: #{tpu_custom_call.1} parent=1 // pred_check_branch
      %769 = sbr.rel (0) target = $region45
    $region44: #{tpu_custom_call.1} parent=1 // pred_region
      %770 = dma.done [#allocation10], 512
    $region45: #{tpu_custom_call.1} parent=1 // pred_fallthru
      _
    %771 = vsyncpa [#allocation3], 1
    %772 = vsyncpa [#allocation6], 1
    %773 = vsyncpa [#allocation4], 1
    %774 = vsyncpa [#allocation10], 1

</llo_original>
